<compile_context>
chip_gen: v6e
topology: v6e:2x2x1
jax: 0.10.0
libtpu: 0.0.40
codegen_flags: <defaults>
</compile_context>

<pallas_src>
import jax
import jax.numpy as jnp
from jax.experimental import pallas as pl
from jax.experimental.pallas import tpu as pltpu  # noqa: F401  (TPU backend parity)


_KEEP_PROB_6X = 1.0 / 64.0   # P(survive six p=0.5 dropouts)
_SCALE_6X = 64.0             # (1 / (1 - 0.5)) ** 6


def mymodel_kernel(u_ref, r_ref, o_ref):
    """Fused `rand_like -> dropout(p=0.5) x 6` for the single returned row.

    u_ref: (1, OUT) f32  U[0,1) values (the torch.rand_like output, row 0)
    r_ref: (1, OUT) f32  U[0,1) values deciding the combined 6-dropout keep mask
    o_ref: (1, OUT) f32  result row
    """
    u = u_ref[...]
    keep = r_ref[...] < _KEEP_PROB_6X
    o_ref[...] = jnp.where(keep, u * _SCALE_6X, jnp.zeros_like(u))


def mymodel_forward(x, w, b, key):
    """Mirror of MyModel.forward.

    x: (B, 8) f32, w: (2, 8) f32, b: (2,) f32 are accepted for interface parity,
    but -- exactly as in the PyTorch module -- the returned value does not depend
    on them: fc1 + the first dropout are overwritten by rand_like, so they are
    not DMA'd into the kernel at all (dead-code elimination per perf review).
    Returns y[0], shape (out_features,) = (2,).
    """
    del x, b  # dead inputs: output is independent of them (see module semantics)
    out_f = w.shape[0]

    ku, kr = jax.random.split(key)
    u = jax.random.uniform(ku, (1, out_f), dtype=jnp.float32)  # rand_like (row 0 only)
    r = jax.random.uniform(kr, (1, out_f), dtype=jnp.float32)  # combined dropout draw

    out = pl.pallas_call(
        mymodel_kernel,
        out_shape=jax.ShapeDtypeStruct((1, out_f), jnp.float32),
        in_specs=[
            pl.BlockSpec((1, out_f), lambda: (0, 0)),
            pl.BlockSpec((1, out_f), lambda: (0, 0)),
        ],
        out_specs=pl.BlockSpec((1, out_f), lambda: (0, 0)),
    )(u, r)

    # x[0] in the PyTorch forward
    return out[0]


if __name__ == "__main__":
    key = jax.random.PRNGKey(0)
    kx, kw, kb, krun = jax.random.split(key, 4)

    B, IN, OUT = 4, 8, 2
    x = jax.random.normal(kx, (B, IN), dtype=jnp.float32)

    # Deterministic "Linear(8, 2)" parameters (Kaiming-uniform-ish range).
    bound = 1.0 / jnp.sqrt(jnp.float32(IN))
    w = jax.random.uniform(kw, (OUT, IN), dtype=jnp.float32, minval=-bound, maxval=bound)
    b = jax.random.uniform(kb, (OUT,), dtype=jnp.float32, minval=-bound, maxval=bound)

    y = mymodel_forward(x, w, b, krun)
    y = jax.block_until_ready(y)

    assert y.shape == (OUT,)
    assert y.dtype == jnp.float32
    # Every element is either 0 (dropped) or 64 * U[0,1) in [0, 64).
    assert bool(jnp.all((y >= 0.0) & (y < 64.0)))
    print("KERNEL_OK")
</pallas_src>

<mosaic_0001>
module attributes {stable_mosaic.version = 11 : i64} {
  func.func @mymodel_kernel(%arg0: memref<1x2xf32, #tpu.memory_space<vmem>>, %arg1: memref<1x2xf32, #tpu.memory_space<vmem>>, %arg2: memref<1x2xf32, #tpu.memory_space<vmem>>) attributes {dimension_semantics = [], scalar_prefetch = 0 : i64, scratch_operands = 0 : i64, tpu.core_type = #tpu.core_type<tc>} {
    %c0 = arith.constant 0 : index
    %c0_0 = arith.constant 0 : index
    %0 = vector.load %arg0[%c0, %c0_0] : memref<1x2xf32, #tpu.memory_space<vmem>>, vector<1x2xf32>
    %c0_1 = arith.constant 0 : index
    %c0_2 = arith.constant 0 : index
    %1 = vector.load %arg1[%c0_1, %c0_2] : memref<1x2xf32, #tpu.memory_space<vmem>>, vector<1x2xf32>
    %cst = arith.constant 1.562500e-02 : f32
    %2 = vector.broadcast %cst : f32 to vector<1x2xf32>
    %3 = arith.cmpf olt, %1, %2 : vector<1x2xf32>
    %cst_3 = arith.constant 6.400000e+01 : f32
    %4 = vector.broadcast %cst_3 : f32 to vector<1x2xf32>
    %5 = arith.mulf %0, %4 : vector<1x2xf32>
    %cst_4 = arith.constant 0.000000e+00 : f32
    %6 = vector.broadcast %cst_4 : f32 to vector<1x2xf32>
    %7 = arith.select %3, %5, %6 : vector<1x2xi1>, vector<1x2xf32>
    %c0_5 = arith.constant 0 : index
    %c0_6 = arith.constant 0 : index
    %8 = vector.load %arg2[%c0_5, %c0_6] : memref<1x2xf32, #tpu.memory_space<vmem>>, vector<1x2xf32>
    tpu.vector_store %arg2[%c0_5, %c0_6], %7 {strides = array<i32>} : memref<1x2xf32, #tpu.memory_space<vmem>>, vector<1x2xf32>,
    return
  }
}

</mosaic_0001>

<llo_original>
// kernel: tpu_custom_call.1
$region0: #{tpu_custom_call.1}
  #allocation0 [shape = 'u32[]', space=smem, size = 0x4, offset = 0x4, fixed_abs, tag = 'smem constant byte address 0x4 - core index']
  #allocation1 [shape = 'u32[144,128]{1,0:T(1,128)}', space=vmem, size = 0x12000, scoped, tag = 'internal scratch']
  %s0 = inlined_call_operand.hbm [shape: f32[1,2], index: 0, kind: input, shape index: {}]
  %s1 = inlined_call_operand.vmem [shape: f32[1,2], index: 1, kind: input, shape index: {}]
  %s2 = inlined_call_operand.hbm [shape: f32[1,2], index: 2, kind: output, shape index: {}]
  %s3 = sld [smem:[#allocation0]]
  $region22: #{tpu_custom_call.1} parent=0
    _
  %s5 = ssub.s32 1, %s3
  %s6 = scalar_select 0, %s5, %s3
  $region1: #{tpu_custom_call.1} parent=0
    #allocation2 [shape = 'u8[512]{0}', space=vmem, size = 0x400, scoped, tag = 'input window, operand 0, single buffered']
    #allocation3 [shape = 's32[1]{0}', space=sflag, size = 0x4, scoped, tag = 'scoped memory for tpu_custom_call.1']
    #allocation4 [shape = 's32[1]{0}', space=sflag, size = 0x4, scoped, tag = 'scoped memory for tpu_custom_call.1']
    #allocation5 [shape = 'u8[512]{0}', space=vmem, size = 0x400, scoped, tag = 'output window, operand 0, single buffered']
    %7 = vsyncpa [#allocation3], 0
    %8 = vsyncpa [#allocation4], 0
    // Predicated region
    $region2: #{tpu_custom_call.1} parent=1 // pred_check
      _
    $region3: #{tpu_custom_call.1} parent=1 // pred_check_branch
      %10 = sbr.rel (0) target = $region5
    $region4: #{tpu_custom_call.1} parent=1 // pred_region
      %s12 = ssub.s32 16, 16
      %13 = vsyncadd [#allocation3], %s12
      %s15 = sshll.u32 [#allocation2], 4
      %s16 = int_to_ptr.vmem [resolvable:$true] %s15
      %18 = dma.hbm_to_vmem [thread:$0]  %s0, 16, %s16, [#allocation3]
    $region5: #{tpu_custom_call.1} parent=1 // pred_fallthru
      _
    // Predicated region
    $region6: #{tpu_custom_call.1} parent=1 // pred_check
      _
    $region7: #{tpu_custom_call.1} parent=1 // pred_check_branch
      %20 = sbr.rel (0) target = $region9
    $region8: #{tpu_custom_call.1} parent=1 // pred_region
      _
    $region9: #{tpu_custom_call.1} parent=1 // pred_fallthru
      _
    // Predicated region
    $region10: #{tpu_custom_call.1} parent=1 // pred_check
      _
    $region11: #{tpu_custom_call.1} parent=1 // pred_check_branch
      %22 = sbr.rel (0) target = $region13
    $region12: #{tpu_custom_call.1} parent=1 // pred_region
      %23 = dma.done [#allocation3], 16
    $region13: #{tpu_custom_call.1} parent=1 // pred_fallthru
      _
    %v24 = vld [vmem:[#allocation2] sm:$0x1]
    %v25 = vld [vmem:[%s1] sm:$0x1]
    %vm26 = vcmp.lt.f32.partialorder %v25, 0.015625
    %v27 = vmul.f32 %v24, 64.0
    %v28 = vsel %vm26, %v27, 0.0
    %vm29 = vcmask 8192
    %30 = vst.msk [vmem:[#allocation5] sm:$0x1] %vm29, %v28
    // Predicated region
    $region14: #{tpu_custom_call.1} parent=1 // pred_check
      _
    $region15: #{tpu_custom_call.1} parent=1 // pred_check_branch
      %32 = sbr.rel (0) target = $region17
    $region16: #{tpu_custom_call.1} parent=1 // pred_region
      %s34 = ssub.s32 16, 16
      %35 = vsyncadd [#allocation4], %s34
      %s37 = sshll.u32 [#allocation5], 4
      %s38 = int_to_ptr.vmem [resolvable:$true] %s37
      %40 = dma.vmem_to_hbm [thread:$0]  %s38, 16, %s2, [#allocation4]
    $region17: #{tpu_custom_call.1} parent=1 // pred_fallthru
      _
    // Predicated region
    $region18: #{tpu_custom_call.1} parent=1 // pred_check
      _
    $region19: #{tpu_custom_call.1} parent=1 // pred_check_branch
      %42 = sbr.rel (0) target = $region21
    $region20: #{tpu_custom_call.1} parent=1 // pred_region
      %43 = dma.done [#allocation4], 16
    $region21: #{tpu_custom_call.1} parent=1 // pred_fallthru
      _
    %44 = vsyncpa [#allocation3], 1
    %45 = vsyncpa [#allocation4], 1

</llo_original>
